<compile_context>
chip_gen: v7x
topology: tpu7x:2x2x1
jax: 0.10.0
libtpu: 0.0.40
codegen_flags: <defaults>
</compile_context>

<pallas_src>
import functools
import math

import jax
import jax.numpy as jnp
from jax.experimental import pallas as pl
from jax.experimental.pallas import tpu as pltpu


def _round_up(x: int, m: int) -> int:
    return (x + m - 1) // m * m


# --------------------------------------------------------------------------- #
# Kernels
# --------------------------------------------------------------------------- #
def _gcn_small_kernel(ops_ref, adj_ref, wt_ref, b_ref, o_ref):
    # One whole (tiny) graph per grid step; exact f32 math.
    support = jnp.dot(ops_ref[0].astype(jnp.float32), wt_ref[...],
                      preferred_element_type=jnp.float32)
    out = jnp.dot(adj_ref[0].astype(jnp.float32), support,
                  preferred_element_type=jnp.float32)
    o_ref[0] = (jnp.maximum(out, 0.0) + b_ref[...]).astype(o_ref.dtype)


def _gcn_reassoc_kernel(ops_ref, adj_ref, wt_ref, b_ref, o_ref, z_ref, *,
                        compute_dtype):
    # ops_ref: (1, T, F_in)      rows [k*T, (k+1)*T) of ops, batch b
    # adj_ref: (1, T, T)         adj[b, i-tile, k-tile]   (original dtype)
    # wt_ref:  (F_in, F_out_p)   pre-transposed, zero-padded weight (resident)
    # b_ref:   (1, F_out_p)      zero-padded bias, f32 (resident)
    # o_ref:   (1, T, F_out_p)   output row tile (resident across k)
    # z_ref:   (T, F_in) f32     accumulator for adj @ ops
    k = pl.program_id(2)

    @pl.when(k == 0)
    def _init():
        z_ref[...] = jnp.zeros_like(z_ref)

    a = adj_ref[0].astype(compute_dtype)      # in-kernel cast (VPU slack)
    x = ops_ref[0].astype(compute_dtype)
    z_ref[...] += jnp.dot(a, x, preferred_element_type=jnp.float32)

    @pl.when(k == pl.num_programs(2) - 1)
    def _finalize():
        z = z_ref[...].astype(wt_ref.dtype)
        out = jnp.dot(z, wt_ref[...], preferred_element_type=jnp.float32)
        o_ref[0] = (jnp.maximum(out, 0.0) + b_ref[...]).astype(o_ref.dtype)


def _gcn_support_kernel(sup_ref, adj_ref, b_ref, o_ref, acc_ref, *,
                        compute_dtype):
    # sup_ref: (1, T, F_out_p)   precomputed support rows [k*T, (k+1)*T)
    # adj_ref: (1, T, T)         adj[b, i-tile, k-tile]   (original dtype)
    k = pl.program_id(2)

    @pl.when(k == 0)
    def _init():
        acc_ref[...] = jnp.zeros_like(acc_ref)

    a = adj_ref[0].astype(compute_dtype)
    s = sup_ref[0].astype(compute_dtype)
    acc_ref[...] += jnp.dot(a, s, preferred_element_type=jnp.float32)

    @pl.when(k == pl.num_programs(2) - 1)
    def _finalize():
        o_ref[0] = (jnp.maximum(acc_ref[...], 0.0) + b_ref[...]).astype(o_ref.dtype)


# --------------------------------------------------------------------------- #
# Wrapper
# --------------------------------------------------------------------------- #
def graph_convolution(ops, adj, weight, bias=None, *,
                      compute_dtype=jnp.float32, tile=1024,
                      small_graph_threshold=128):
    """relu(adj @ (ops @ weight.T)) + bias  (GVAE GraphConvolution forward).

    compute_dtype: MXU operand dtype on the tiled path.  float32 (default)
    matches the PyTorch layer exactly; bfloat16 is an opt-in fast path
    (f32 accumulation is kept either way).
    """
    B, N, F_in = ops.shape
    F_out = weight.shape[0]
    out_dtype = ops.dtype
    cd = jnp.dtype(compute_dtype)

    bias_f32 = (jnp.zeros((F_out,), jnp.float32) if bias is None
                else bias.astype(jnp.float32))

    # ---- small-graph path: one full-extent block per batch entry ----------
    if N <= small_graph_threshold:
        w_t = weight.T.astype(jnp.float32)              # (F_in, F_out)
        b2 = bias_f32.reshape(1, F_out)
        return pl.pallas_call(
            _gcn_small_kernel,
            out_shape=jax.ShapeDtypeStruct((B, N, F_out), out_dtype),
            grid_spec=pltpu.PrefetchScalarGridSpec(
                num_scalar_prefetch=0,
                grid=(B,),
                in_specs=[
                    pl.BlockSpec((1, N, F_in), lambda b: (b, 0, 0)),
                    pl.BlockSpec((1, N, N), lambda b: (b, 0, 0)),
                    pl.BlockSpec((F_in, F_out), lambda b: (0, 0)),
                    pl.BlockSpec((1, F_out), lambda b: (0, 0)),
                ],
                out_specs=pl.BlockSpec((1, N, F_out), lambda b: (b, 0, 0)),
            ),
            compiler_params=pltpu.CompilerParams(
                dimension_semantics=("parallel",)),
        )(ops, adj, w_t, b2)

    # ---- tiled path --------------------------------------------------------
    tile = max(128, (tile // 128) * 128)
    F_out_p = _round_up(F_out, 128)                      # lane-dense stores
    T = min(tile, _round_up(N, 128))
    N_p = _round_up(N, T)
    # v7x has 2 TensorCores sharing the "parallel" grid axes: ensure >= 2
    # (b, i) blocks when the tile can be shrunk without hurting alignment.
    while B * (N_p // T) < 2 and T > 256:
        T = max(256, (T // 2) // 128 * 128)
        N_p = _round_up(N, T)

    # Pad only when needed; never cast adj/ops in the wrapper (the adjacency
    # stream dominates HBM traffic -- tiles are cast in-kernel instead).
    if N_p != N:
        ops_in = jnp.pad(ops, ((0, 0), (0, N_p - N), (0, 0)))
        adj_in = jnp.pad(adj, ((0, 0), (0, N_p - N), (0, N_p - N)))
    else:
        ops_in, adj_in = ops, adj

    b_p = jnp.pad(bias_f32, (0, F_out_p - F_out)).reshape(1, F_out_p)

    grid = (B, N_p // T, N_p // T)
    adj_b = jnp.dtype(adj.dtype).itemsize
    out_b = jnp.dtype(out_dtype).itemsize

    if F_in <= F_out_p:
        # (adj @ ops) @ W^T -- cheap inner loop, W/ReLU/bias in finalize.
        ops_b = jnp.dtype(ops.dtype).itemsize
        w_t = jnp.pad(weight.T.astype(cd), ((0, 0), (0, F_out_p - F_out)))
        kernel = functools.partial(_gcn_reassoc_kernel, compute_dtype=cd)
        in_specs = [
            pl.BlockSpec((1, T, F_in), lambda b, i, k: (b, k, 0)),   # ops slab
            pl.BlockSpec((1, T, T), lambda b, i, k: (b, i, k)),      # adj tile
            pl.BlockSpec((F_in, F_out_p), lambda b, i, k: (0, 0)),   # weight
            pl.BlockSpec((1, F_out_p), lambda b, i, k: (0, 0)),      # bias
        ]
        args = (ops_in, adj_in, w_t, b_p)
        scratch = [pltpu.VMEM((T, F_in), jnp.float32)]
        vmem_bytes = (2 * T * T * adj_b + 2 * T * F_in * ops_b
                      + 2 * F_in * F_out_p * cd.itemsize + 2 * F_out_p * 4
                      + 2 * T * F_out_p * out_b + T * F_in * 4)
        flops = 2 * B * N_p * N_p * F_in + 2 * B * N_p * F_in * F_out_p
        bytes_accessed = (B * N_p * N_p * adj_b
                          + B * (N_p // T) * N_p * F_in * ops_b
                          + B * N_p * F_out_p * out_b
                          + F_in * F_out_p * cd.itemsize + F_out_p * 4)
    else:
        # adj @ support with support = ops @ W^T hoisted out of the grid loop.
        support = jnp.einsum("bnf,of->bno", ops_in, weight).astype(cd)
        support = jnp.pad(support, ((0, 0), (0, 0), (0, F_out_p - F_out)))
        kernel = functools.partial(_gcn_support_kernel, compute_dtype=cd)
        in_specs = [
            pl.BlockSpec((1, T, F_out_p), lambda b, i, k: (b, k, 0)),  # support
            pl.BlockSpec((1, T, T), lambda b, i, k: (b, i, k)),        # adj tile
            pl.BlockSpec((1, F_out_p), lambda b, i, k: (0, 0)),        # bias
        ]
        args = (support, adj_in, b_p)
        scratch = [pltpu.VMEM((T, F_out_p), jnp.float32)]
        vmem_bytes = (2 * T * T * adj_b + 2 * T * F_out_p * cd.itemsize
                      + 2 * F_out_p * 4 + 2 * T * F_out_p * out_b
                      + T * F_out_p * 4)
        flops = 2 * B * N_p * N_p * F_out_p
        bytes_accessed = (B * N_p * N_p * adj_b
                          + B * (N_p // T) * N_p * F_out_p * cd.itemsize
                          + B * N_p * F_out_p * out_b + F_out_p * 4)

    # 2x estimate + headroom for in-kernel cast temporaries; 56 MiB cap keeps
    # slack inside v7x's 64 MiB per-TC VMEM (v5e/v6e have 128 MiB).
    vmem_limit = int(min(56 * 2 ** 20, 2 * vmem_bytes + 8 * 2 ** 20))

    out_p = pl.pallas_call(
        kernel,
        out_shape=jax.ShapeDtypeStruct((B, N_p, F_out_p), out_dtype),
        grid_spec=pltpu.PrefetchScalarGridSpec(
            num_scalar_prefetch=0,
            grid=grid,
            in_specs=in_specs,
            out_specs=pl.BlockSpec((1, T, F_out_p), lambda b, i, k: (b, i, 0)),
            scratch_shapes=scratch,
        ),
        compiler_params=pltpu.CompilerParams(
            dimension_semantics=("parallel", "parallel", "arbitrary"),
            vmem_limit_bytes=vmem_limit,
        ),
        cost_estimate=pl.CostEstimate(flops=flops, transcendentals=0,
                                      bytes_accessed=bytes_accessed),
    )(*args)

    if N_p == N and F_out_p == F_out:
        return out_p                       # no padding added, no slice needed
    return out_p[:, :N, :F_out]


# --------------------------------------------------------------------------- #
# Demo / self-test
# --------------------------------------------------------------------------- #
if __name__ == "__main__":
    key = jax.random.PRNGKey(0)

    def init_params(k, f_in, f_out):
        kw, kb = jax.random.split(k)
        bound = math.sqrt(6.0 / f_in)                       # kaiming_uniform_
        w = jax.random.uniform(kw, (f_out, f_in), jnp.float32, -bound, bound)
        stdv = 1.0 / math.sqrt(f_in)
        b = jax.random.uniform(kb, (f_out,), jnp.float32, -stdv, stdv)
        return w, b

    def reference(ops, adj, w, b):
        support = jnp.einsum("bnf,of->bno", ops, w, precision="highest")
        out = jnp.maximum(
            jnp.einsum("bnm,bmo->bno", adj, support, precision="highest"), 0.0)
        return out + b

    def make_inputs(k, B, N, F_in):
        k0, k1 = jax.random.split(k)
        ops = jax.random.normal(k0, (B, N, F_in), jnp.float32)
        a = jax.random.uniform(k1, (B, N, N), jnp.float32)
        adj = 0.5 * (a + jnp.swapaxes(a, -1, -2))
        return ops, adj

    # 1) module-native small shapes: batch=2, nodes=8, 16 -> 32 (small path)
    B, N, F_in, F_out = 2, 8, 16, 32
    k0, k1, key = jax.random.split(key, 3)
    ops, adj = make_inputs(k0, B, N, F_in)
    w, b = init_params(k1, F_in, F_out)
    out = jax.block_until_ready(graph_convolution(ops, adj, w, b))
    assert out.shape == (B, N, F_out)
    assert jnp.allclose(out, reference(ops, adj, w, b), atol=1e-3, rtol=1e-3)

    # 2) tiled reassociated path (F_in <= F_out_pad): f32 exact + bf16 fast
    B, N, F_in, F_out = 2, 512, 64, 96
    k0, k1, key = jax.random.split(key, 3)
    ops, adj = make_inputs(k0, B, N, F_in)
    w, b = init_params(k1, F_in, F_out)
    ref = reference(ops, adj, w, b)
    out_f32 = jax.block_until_ready(
        graph_convolution(ops, adj, w, b, compute_dtype=jnp.float32))
    assert out_f32.shape == (B, N, F_out)
    assert jnp.allclose(out_f32, ref, atol=1e-1, rtol=1e-2)
    out_bf16 = jax.block_until_ready(
        graph_convolution(ops, adj, w, b, compute_dtype=jnp.bfloat16))
    assert jnp.allclose(out_bf16, ref, atol=1.0, rtol=5e-2)

    # 3) tiled precomputed-support path (F_in > F_out_pad)
    B, N, F_in, F_out = 1, 256, 192, 64
    k0, k1, key = jax.random.split(key, 3)
    ops, adj = make_inputs(k0, B, N, F_in)
    w, b = init_params(k1, F_in, F_out)
    out_sup = jax.block_until_ready(
        graph_convolution(ops, adj, w, b, compute_dtype=jnp.float32))
    assert out_sup.shape == (B, N, F_out)
    assert jnp.allclose(out_sup, reference(ops, adj, w, b), atol=1e-1, rtol=1e-2)

    print("KERNEL_OK")
</pallas_src>

<mosaic_0001>
module attributes {stable_mosaic.version = 11 : i64} {
  func.func @_gcn_small_kernel(%arg0: i32, %arg1: memref<1x8x16xf32, #tpu.memory_space<vmem>>, %arg2: memref<1x8x8xf32, #tpu.memory_space<vmem>>, %arg3: memref<16x32xf32, #tpu.memory_space<vmem>>, %arg4: memref<1x32xf32, #tpu.memory_space<vmem>>, %arg5: memref<1x8x32xf32, #tpu.memory_space<vmem>>) attributes {dimension_semantics = [#tpu.dimension_semantics<parallel>], iteration_bounds = array<i64: 2>, scalar_prefetch = 0 : i64, scratch_operands = 0 : i64, tpu.core_type = #tpu.core_type<tc>, window_params = [{transform_indices = @transform_0, window_bounds = array<i64: 1, 8, 16>}, {transform_indices = @transform_1, window_bounds = array<i64: 1, 8, 8>}, {pipeline_mode = #tpu.pipeline_mode<synchronous>, transform_indices = @transform_2, window_bounds = array<i64: 16, 32>}, {pipeline_mode = #tpu.pipeline_mode<synchronous>, transform_indices = @transform_3, window_bounds = array<i64: 1, 32>}, {transform_indices = @transform_4, window_bounds = array<i64: 1, 8, 32>}]} {
    %c0 = arith.constant 0 : index
    %c0_0 = arith.constant 0 : index
    %c0_1 = arith.constant 0 : index
    %0 = vector.load %arg1[%c0, %c0_0, %c0_1] : memref<1x8x16xf32, #tpu.memory_space<vmem>>, vector<1x8x16xf32>
    %1 = vector.shape_cast %0 : vector<1x8x16xf32> to vector<8x16xf32>
    %c0_2 = arith.constant 0 : index
    %c0_3 = arith.constant 0 : index
    %2 = vector.load %arg3[%c0_2, %c0_3] : memref<16x32xf32, #tpu.memory_space<vmem>>, vector<16x32xf32>
    %cst = arith.constant dense<0.000000e+00> : vector<8x32xf32>
    %3 = tpu.matmul %1, %2, %cst {dimension_numbers = #tpu.dot_dimension_numbers<[1], [0], [0], [1], [0, 0, 1, 1], [], []>} : vector<8x16xf32>, vector<16x32xf32>, vector<8x32xf32> -> vector<8x32xf32>
    %c0_4 = arith.constant 0 : index
    %c0_5 = arith.constant 0 : index
    %c0_6 = arith.constant 0 : index
    %4 = vector.load %arg2[%c0_4, %c0_5, %c0_6] : memref<1x8x8xf32, #tpu.memory_space<vmem>>, vector<1x8x8xf32>
    %5 = vector.shape_cast %4 : vector<1x8x8xf32> to vector<8x8xf32>
    %cst_7 = arith.constant dense<0.000000e+00> : vector<8x32xf32>
    %6 = tpu.matmul %5, %3, %cst_7 {dimension_numbers = #tpu.dot_dimension_numbers<[1], [0], [0], [1], [0, 0, 1, 1], [], []>} : vector<8x8xf32>, vector<8x32xf32>, vector<8x32xf32> -> vector<8x32xf32>
    %cst_8 = arith.constant 0.000000e+00 : f32
    %7 = vector.broadcast %cst_8 : f32 to vector<8x32xf32>
    %8 = arith.maximumf %6, %7 : vector<8x32xf32>
    %c0_9 = arith.constant 0 : index
    %c0_10 = arith.constant 0 : index
    %9 = vector.load %arg4[%c0_9, %c0_10] : memref<1x32xf32, #tpu.memory_space<vmem>>, vector<1x32xf32>
    %10 = vector.broadcast %9 : vector<1x32xf32> to vector<8x32xf32>
    %11 = arith.addf %8, %10 : vector<8x32xf32>
    %c0_11 = arith.constant 0 : index
    %c0_12 = arith.constant 0 : index
    %c0_13 = arith.constant 0 : index
    %12 = vector.load %arg5[%c0_11, %c0_12, %c0_13] : memref<1x8x32xf32, #tpu.memory_space<vmem>>, vector<1x8x32xf32>
    %13 = vector.shape_cast %12 : vector<1x8x32xf32> to vector<8x32xf32>
    %14 = vector.shape_cast %11 : vector<8x32xf32> to vector<1x8x32xf32>
    tpu.vector_store %arg5[%c0_11, %c0_12, %c0_13], %14 {strides = array<i32>} : memref<1x8x32xf32, #tpu.memory_space<vmem>>, vector<1x8x32xf32>,
    return
  }
  func.func @transform_0(%arg0: i32) -> (i32, i32, i32) {
    %c0_i32 = arith.constant 0 : i32
    %c0_i32_0 = arith.constant 0 : i32
    %c0_i32_1 = arith.constant 0 : i32
    return %arg0, %c0_i32, %c0_i32_0 : i32, i32, i32
  }
  func.func @transform_1(%arg0: i32) -> (i32, i32, i32) {
    %c0_i32 = arith.constant 0 : i32
    %c0_i32_0 = arith.constant 0 : i32
    %c0_i32_1 = arith.constant 0 : i32
    return %arg0, %c0_i32, %c0_i32_0 : i32, i32, i32
  }
  func.func @transform_2(%arg0: i32) -> (i32, i32) {
    %c0_i32 = arith.constant 0 : i32
    %c0_i32_0 = arith.constant 0 : i32
    %c0_i32_1 = arith.constant 0 : i32
    return %c0_i32, %c0_i32_0 : i32, i32
  }
  func.func @transform_3(%arg0: i32) -> (i32, i32) {
    %c0_i32 = arith.constant 0 : i32
    %c0_i32_0 = arith.constant 0 : i32
    %c0_i32_1 = arith.constant 0 : i32
    return %c0_i32, %c0_i32_0 : i32, i32
  }
  func.func @transform_4(%arg0: i32) -> (i32, i32, i32) {
    %c0_i32 = arith.constant 0 : i32
    %c0_i32_0 = arith.constant 0 : i32
    %c0_i32_1 = arith.constant 0 : i32
    return %arg0, %c0_i32, %c0_i32_0 : i32, i32, i32
  }
}

</mosaic_0001>

<llo_original>
// kernel: tpu_custom_call.1
$region0: #{tpu_custom_call.1}
  #allocation0 [shape = 'u32[]', space=smem, size = 0x4, offset = 0x4, fixed_abs, tag = 'smem constant byte address 0x4 - core index']
  #allocation1 [shape = 'u32[144,128]{1,0:T(1,128)}', space=vmem, size = 0x12000, scoped, tag = 'internal scratch']
  %s0 = inlined_call_operand.hbm [shape: f32[2,8,16], index: 0, kind: input, shape index: {}]
  %s1 = inlined_call_operand.hbm [shape: f32[2,8,8], index: 1, kind: input, shape index: {}]
  %s2 = inlined_call_operand.hbm [shape: f32[16,32], index: 2, kind: input, shape index: {}]
  %s3 = inlined_call_operand.vmem [shape: f32[1,32], index: 3, kind: input, shape index: {}]
  %s4 = inlined_call_operand.hbm [shape: f32[2,8,32], index: 4, kind: output, shape index: {}]
  %s5 = sld [smem:[#allocation0]]
  $region61: #{tpu_custom_call.1} parent=0
    _
  %s7 = ssub.s32 1, %s5
  %s8 = scalar_select 0, %s7, %s5
  $region1: #{tpu_custom_call.1} parent=0
    #allocation2 [shape = 'u8[8192]{0}', space=vmem, size = 0x2000, scoped, tag = 'input window, operand 0']
    #allocation3 [shape = 's32[2]{0}', space=sflag, size = 0x8, scoped, tag = 'scoped memory for tpu_custom_call.1']
    #allocation4 [shape = 's32[2]{0}', space=sflag, size = 0x8, scoped, tag = 'scoped memory for tpu_custom_call.1']
    #allocation5 [shape = 'u8[8192]{0}', space=vmem, size = 0x2000, scoped, tag = 'input window, operand 1']
    #allocation6 [shape = 's32[2]{0}', space=sflag, size = 0x8, scoped, tag = 'scoped memory for tpu_custom_call.1']
    #allocation7 [shape = 'u8[8192]{0}', space=vmem, size = 0x2000, scoped, tag = 'input window, operand 2, single buffered']
    #allocation8 [shape = 'u8[8192]{0}', space=vmem, size = 0x2000, scoped, tag = 'output window, operand 0']
    %9 = vsyncpa [#allocation3], 0
    %s10 = scalar_lea.sflag [#allocation3], 1
    %11 = vsyncpa %s10, 0
    %12 = vsyncpa [#allocation6], 0
    %s13 = scalar_lea.sflag [#allocation6], 1
    %14 = vsyncpa %s13, 0
    %15 = vsyncpa [#allocation4], 0
    %s16 = scalar_lea.sflag [#allocation4], 1
    %17 = vsyncpa %s16, 0
    loop: start=0, step=1, limit=4
    $region2: #{tpu_custom_call.1} parent=1 // loop_pre_header
      _
    $region3: #{tpu_custom_call.1} parent=1 // loop_header
      %s19 = sphi 0, %s23
      %p20 = scmp.ge.s32.totalorder %s19, 4
      %s29 = sphi 0, %s31
      %s32 = sphi 0, %s29
      %s33 = sphi 0, %s32
      %s49 = sphi 0, %s33
      %s55 = sphi 0, %s57
      %s58 = sphi 0, %s55
      %s59 = sphi 0, %s58
      %s75 = sphi 0, %s59
      %s79 = sphi 0, %s79
      %s81 = sphi 0, %s79
      %s82 = sphi 0, %s81
      %s96 = sphi 0, %s82
      %s100 = sphi 0, %s100
      %s102 = sphi 0, %s100
      %s103 = sphi 0, %s102
      %s117 = sphi 0, %s103
      %s123 = sphi 0, %s125
      %s126 = sphi 0, %s123
      %s127 = sphi 0, %s126
      %s143 = sphi 0, %s127
    $region4: #{tpu_custom_call.1} parent=1 // loop_header_branch
      %22 = sbr.rel (%p20) target = $region8
    $region5: #{tpu_custom_call.1} parent=1 // loop_body
      %s24 = ssub.s32 %s19, 1
      %s25 = ssub.s32 %s19, 2
      %s26 = sadd.s32 %s19, 1
      %s27 = ssub.s32 %s19, %s26
      %p28 = scmp.eq.s32.totalorder %s27, 0
      %s30 = sadd.s32 %s29, 1
      %s31 = scalar_select %p28, %s29, %s30
      %p34 = pneg %p28
      %p35 = scmp.eq.s32.totalorder %s19, 1
      %p36 = por %p34, %p35
      %p37 = scmp.ne.s32.totalorder %s29, %s32
      %p38 = scmp.eq.s32.totalorder %s19, 0
      %p39 = por %p37, %p38
      %p40 = scmp.ne.s32.totalorder %s29, %s32
      %p41 = scmp.eq.s32.totalorder %s24, 1
      %p42 = por %p40, %p41
      %p43 = scmp.ne.s32.totalorder %s32, %s33
      %p44 = scmp.eq.s32.totalorder %s24, 0
      %p45 = por %p43, %p44
      %p46 = scmp.ne.s32.totalorder %s32, %s33
      %p47 = scmp.eq.s32.totalorder %s25, 1
      %p48 = por %p46, %p47
      %p50 = scmp.ne.s32.totalorder %s33, %s49
      %p51 = scmp.eq.s32.totalorder %s25, 0
      %p52 = por %p50, %p51
      %s53 = ssub.s32 %s19, %s26
      %p54 = scmp.eq.s32.totalorder %s53, 0
      %s56 = sadd.s32 %s55, 1
      %s57 = scalar_select %p54, %s55, %s56
      %p60 = pneg %p54
      %p61 = scmp.eq.s32.totalorder %s19, 1
      %p62 = por %p60, %p61
      %p63 = scmp.ne.s32.totalorder %s55, %s58
      %p64 = scmp.eq.s32.totalorder %s19, 0
      %p65 = por %p63, %p64
      %p66 = scmp.ne.s32.totalorder %s55, %s58
      %p67 = scmp.eq.s32.totalorder %s24, 1
      %p68 = por %p66, %p67
      %p69 = scmp.ne.s32.totalorder %s58, %s59
      %p70 = scmp.eq.s32.totalorder %s24, 0
      %p71 = por %p69, %p70
      %p72 = scmp.ne.s32.totalorder %s58, %s59
      %p73 = scmp.eq.s32.totalorder %s25, 1
      %p74 = por %p72, %p73
      %p76 = scmp.ne.s32.totalorder %s59, %s75
      %p77 = scmp.eq.s32.totalorder %s25, 0
      %p78 = por %p76, %p77
      %s80 = sadd.s32 %s79, 1
      %p83 = scmp.eq.s32.totalorder %s19, 1
      %p84 = scmp.ne.s32.totalorder %s79, %s81
      %p85 = scmp.eq.s32.totalorder %s19, 0
      %p86 = por %p84, %p85
      %p87 = scmp.ne.s32.totalorder %s79, %s81
      %p88 = scmp.eq.s32.totalorder %s24, 1
      %p89 = por %p87, %p88
      %p90 = scmp.ne.s32.totalorder %s81, %s82
      %p91 = scmp.eq.s32.totalorder %s24, 0
      %p92 = por %p90, %p91
      %p93 = scmp.ne.s32.totalorder %s81, %s82
      %p94 = scmp.eq.s32.totalorder %s25, 1
      %p95 = por %p93, %p94
      %p97 = scmp.ne.s32.totalorder %s82, %s96
      %p98 = scmp.eq.s32.totalorder %s25, 0
      %p99 = por %p97, %p98
      %s101 = sadd.s32 %s100, 1
      %p104 = scmp.eq.s32.totalorder %s19, 1
      %p105 = scmp.ne.s32.totalorder %s100, %s102
      %p106 = scmp.eq.s32.totalorder %s19, 0
      %p107 = por %p105, %p106
      %p108 = scmp.ne.s32.totalorder %s100, %s102
      %p109 = scmp.eq.s32.totalorder %s24, 1
      %p110 = por %p108, %p109
      %p111 = scmp.ne.s32.totalorder %s102, %s103
      %p112 = scmp.eq.s32.totalorder %s24, 0
      %p113 = por %p111, %p112
      %p114 = scmp.ne.s32.totalorder %s102, %s103
      %p115 = scmp.eq.s32.totalorder %s25, 1
      %p116 = por %p114, %p115
      %p118 = scmp.ne.s32.totalorder %s103, %s117
      %p119 = scmp.eq.s32.totalorder %s25, 0
      %p120 = por %p118, %p119
      %s121 = ssub.s32 %s19, %s26
      %p122 = scmp.eq.s32.totalorder %s121, 0
      %s124 = sadd.s32 %s123, 1
      %s125 = scalar_select %p122, %s123, %s124
      %p128 = pneg %p122
      %p129 = scmp.eq.s32.totalorder %s19, 1
      %p130 = por %p128, %p129
      %p131 = scmp.ne.s32.totalorder %s123, %s126
      %p132 = scmp.eq.s32.totalorder %s19, 0
      %p133 = por %p131, %p132
      %p134 = scmp.ne.s32.totalorder %s123, %s126
      %p135 = scmp.eq.s32.totalorder %s24, 1
      %p136 = por %p134, %p135
      %p137 = scmp.ne.s32.totalorder %s126, %s127
      %p138 = scmp.eq.s32.totalorder %s24, 0
      %p139 = por %p137, %p138
      %p140 = scmp.ne.s32.totalorder %s126, %s127
      %p141 = scmp.eq.s32.totalorder %s25, 1
      %p142 = por %p140, %p141
      %p144 = scmp.ne.s32.totalorder %s127, %s143
      %p145 = scmp.eq.s32.totalorder %s25, 0
      %p146 = por %p144, %p145
      %p147 = scmp.le.s32.totalorder 1, %s19
      %p148 = scmp.lt.s32.totalorder %s19, 3
      %p149 = pnand %p147, %p148
      %p150 = pneg %p149
      // Predicated region
      $region9: #{tpu_custom_call.1} parent=5 // pred_check
        _
      $region10: #{tpu_custom_call.1} parent=5 // pred_check_branch
        %152 = sbr.rel (%p149) target = $region12
      $region11: #{tpu_custom_call.1} parent=5 // pred_region
        %s153 = ssub.s32 %s19, 1
        // Predicated region
        $region13: #{tpu_custom_call.1} parent=11 // pred_check
          %p154 = pneg %p92
        $region14: #{tpu_custom_call.1} parent=11 // pred_check_branch
          %156 = sbr.rel (%p154) target = $region16
        $region15: #{tpu_custom_call.1} parent=11 // pred_region
          %s158 = ssub.s32 256, 256
          %159 = vsyncadd [#allocation6], %s158
          %s160 = sshll.u32 [#allocation7], 4
          %s161 = int_to_ptr.vmem [resolvable:$true] %s160
          %166 = dma.hbm_to_vmem [thread:$0]  %s2, 256, %s161, [#allocation6], 128, 128, 8
        $region16: #{tpu_custom_call.1} parent=11 // pred_fallthru
          _
        // Predicated region
        $region17: #{tpu_custom_call.1} parent=11 // pred_check
          %p167 = pneg %p113
        $region18: #{tpu_custom_call.1} parent=11 // pred_check_branch
          %169 = sbr.rel (%p167) target = $region20
        $region19: #{tpu_custom_call.1} parent=11 // pred_region
          _
        $region20: #{tpu_custom_call.1} parent=11 // pred_fallthru
          _
      $region12: #{tpu_custom_call.1} parent=5 // pred_fallthru
        _
      %p170 = scmp.lt.s32.totalorder %s19, 2
      // Predicated region
      $region21: #{tpu_custom_call.1} parent=5 // pred_check
        %p171 = pneg %p170
      $region22: #{tpu_custom_call.1} parent=5 // pred_check_branch
        %173 = sbr.rel (%p171) target = $region24
      $region23: #{tpu_custom_call.1} parent=5 // pred_region
        // Predicated region
        $region25: #{tpu_custom_call.1} parent=23 // pred_check
          %p174 = pneg %p39
        $region26: #{tpu_custom_call.1} parent=23 // pred_check_branch
          %176 = sbr.rel (%p174) target = $region28
        $region27: #{tpu_custom_call.1} parent=23 // pred_region
          %s177 = sand.u32 %s29, 1
          %s178 = scalar_lea.sflag [#allocation3], %s177
          %s179 = sand.u32 %s29, 1
          %s180 = smul.addr %s179, 8
          %s181 = scalar_lea.vmem [#allocation2], %s180
          %s183 = ssub.s32 128, 128
          %184 = vsyncadd %s178, %s183
          %s185 = smul.addr %s19, 128
          %s186 = scalar_lea.hbm %s0, %s185
          %s188 = sshll.u32 %s181, 4
          %s189 = int_to_ptr.vmem [resolvable:$true] %s188
          %191 = dma.hbm_to_vmem [thread:$0]  %s186, 128, %s189, %s178
        $region28: #{tpu_custom_call.1} parent=23 // pred_fallthru
          _
        // Predicated region
        $region29: #{tpu_custom_call.1} parent=23 // pred_check
          %p192 = pneg %p65
        $region30: #{tpu_custom_call.1} parent=23 // pred_check_branch
          %194 = sbr.rel (%p192) target = $region32
        $region31: #{tpu_custom_call.1} parent=23 // pred_region
          %s195 = sand.u32 %s19, 1
          %s196 = scalar_lea.sflag [#allocation6], %s195
          %s197 = sand.u32 %s55, 1
          %s198 = smul.addr %s197, 8
          %s199 = scalar_lea.vmem [#allocation5], %s198
          %s201 = ssub.s32 128, 128
          %202 = vsyncadd %s196, %s201
          %s203 = smul.addr %s19, 128
          %s204 = scalar_lea.hbm %s1, %s203
          %s206 = sshll.u32 %s199, 4
          %s207 = int_to_ptr.vmem [resolvable:$true] %s206
          %209 = dma.hbm_to_vmem [thread:$0]  %s204, 128, %s207, %s196
        $region32: #{tpu_custom_call.1} parent=23 // pred_fallthru
          _
      $region24: #{tpu_custom_call.1} parent=5 // pred_fallthru
        _
      %p210 = scmp.le.s32.totalorder 1, %s19
      %p211 = scmp.lt.s32.totalorder %s19, 3
      %p212 = pnand %p210, %p211
      %p213 = pneg %p212
      // Predicated region
      $region33: #{tpu_custom_call.1} parent=5 // pred_check
        _
      $region34: #{tpu_custom_call.1} parent=5 // pred_check_branch
        %215 = sbr.rel (%p212) target = $region36
      $region35: #{tpu_custom_call.1} parent=5 // pred_region
        %s216 = ssub.s32 %s19, 1
        %s217 = sand.u32 %s32, 1
        %s218 = scalar_lea.sflag [#allocation3], %s217
        %s219 = sand.u32 %s32, 1
        %s220 = smul.addr %s219, 8
        %s221 = scalar_lea.vmem [#allocation2], %s220
        // Predicated region
        $region37: #{tpu_custom_call.1} parent=35 // pred_check
          %p222 = pneg %p45
        $region38: #{tpu_custom_call.1} parent=35 // pred_check_branch
          %224 = sbr.rel (%p222) target = $region40
        $region39: #{tpu_custom_call.1} parent=35 // pred_region
          %225 = dma.done %s218, 128
        $region40: #{tpu_custom_call.1} parent=35 // pred_fallthru
          _
        %s226 = sand.u32 %s24, 1
        %s227 = scalar_lea.sflag [#allocation6], %s226
        %s228 = sand.u32 %s58, 1
        %s229 = smul.addr %s228, 8
        %s230 = scalar_lea.vmem [#allocation5], %s229
        // Predicated region
        $region41: #{tpu_custom_call.1} parent=35 // pred_check
          %p231 = pneg %p71
        $region42: #{tpu_custom_call.1} parent=35 // pred_check_branch
          %233 = sbr.rel (%p231) target = $region44
        $region43: #{tpu_custom_call.1} parent=35 // pred_region
          %234 = dma.done %s227, 128
        $region44: #{tpu_custom_call.1} parent=35 // pred_fallthru
          _
        // Predicated region
        $region45: #{tpu_custom_call.1} parent=35 // pred_check
          %p235 = pneg %p92
        $region46: #{tpu_custom_call.1} parent=35 // pred_check_branch
          %237 = sbr.rel (%p235) target = $region48
        $region47: #{tpu_custom_call.1} parent=35 // pred_region
          %238 = dma.done [#allocation6], 256
        $region48: #{tpu_custom_call.1} parent=35 // pred_fallthru
          _
        %s239 = sand.u32 %s32, 1
        %s240 = scalar_lea.sflag [#allocation3], %s239
        %s241 = sand.u32 %s32, 1
        %s242 = smul.addr %s241, 8
        %s243 = scalar_lea.vmem [#allocation2], %s242
        %p244 = pneg %p45
        %p245 = pneg %p42
        %s246 = sand.u32 %s24, 1
        %s247 = scalar_lea.sflag [#allocation6], %s246
        %s248 = sand.u32 %s58, 1
        %s249 = smul.addr %s248, 8
        %s250 = scalar_lea.vmem [#allocation5], %s249
        %p251 = pneg %p71
        %p252 = pneg %p68
        %p253 = pneg %p92
        %p254 = pneg %p89
        %p255 = pneg %p113
        %p256 = pneg %p110
        %p257 = pneg %p139
        %p258 = pneg %p136
        %s259 = sand.u32 %s126, 1
        %s260 = scalar_lea.sflag [#allocation4], %s259
        %s261 = sand.u32 %s126, 1
        %s262 = smul.addr %s261, 8
        %s263 = scalar_lea.vmem [#allocation8], %s262
        %v264 = vld [vmem:[%s221] sm:$0xff]
        %v265 = vld [vmem:[#allocation7] sm:$0xff]
        %v266 = vld [vmem:[#allocation7 + $0x8] sm:$0xff]
        %vm267 = vcmask 130048
        %v269 = vsel %vm267, %v264, 0
        %271 = vmatprep.subr.mxu0 0.0
        %272 = vmatpush1.msra.mxu0 %v265
        %273 = vmatprep.subr.mxu0 0.0
        %274 = vmatpush1.msra.mxu0 %v266
        %275 = vmatprep.subr.mxu0 0.0
        %276 = vmatpush1.msra.mxu0 0.0
        %277 = vmatprep.subr.mxu0 0.0
        %278 = vmatpush1.msra.mxu0 0.0
        %279 = vmatprep.subr.mxu0 0.0
        %280 = vmatpush1.msra.mxu0 0.0
        %281 = vmatprep.subr.mxu0 0.0
        %282 = vmatpush1.msra.mxu0 0.0
        %283 = vmatprep.subr.mxu0 0.0
        %284 = vmatpush1.msra.mxu0 0.0
        %285 = vmatprep.subr.mxu0 0.0
        %286 = vmatpush1.msra.mxu0 0.0
        %287 = vmatprep.subr.mxu0 0.0
        %288 = vmatpush1.msra.mxu0 0.0
        %289 = vmatprep.subr.mxu0 0.0
        %290 = vmatpush1.msra.mxu0 0.0
        %291 = vmatprep.subr.mxu0 0.0
        %292 = vmatpush1.msra.mxu0 0.0
        %293 = vmatprep.subr.mxu0 0.0
        %294 = vmatpush1.msra.mxu0 0.0
        %295 = vmatprep.subr.mxu0 0.0
        %296 = vmatpush1.msra.mxu0 0.0
        %297 = vmatprep.subr.mxu0 0.0
        %298 = vmatpush1.msra.mxu0 0.0
        %299 = vmatprep.subr.mxu0 0.0
        %300 = vmatpush1.msra.mxu0 0.0
        %301 = vmatprep.subr.mxu0 0.0
        %302 = vmatpush1.msra.mxu0 0.0
        %303 = vmatprep.subr.mxu0 0.0
        %304 = vmatpush1.msra.mxu0 0.0
        %305 = vmatprep.subr.mxu0 0.0
        %306 = vmatpush1.msra.mxu0 0.0
        %307 = vmatprep.subr.mxu0 0.0
        %308 = vmatpush1.msra.mxu0 0.0
        %309 = vmatprep.subr.mxu0 0.0
        %310 = vmatpush1.msra.mxu0 0.0
        %311 = vmatprep.subr.mxu0 0.0
        %312 = vmatpush1.msra.mxu0 0.0
        %313 = vmatprep.subr.mxu0 0.0
        %314 = vmatpush1.msra.mxu0 0.0
        %315 = vmatprep.subr.mxu0 0.0
        %316 = vmatpush1.msra.mxu0 0.0
        %317 = vmatprep.subr.mxu0 0.0
        %318 = vmatpush1.msra.mxu0 0.0
        %319 = vmatprep.subr.mxu0 0.0
        %320 = vmatpush1.msra.mxu0 0.0
        %321 = vmatprep.subr.mxu0 0.0
        %322 = vmatpush1.msra.mxu0 0.0
        %323 = vmatprep.subr.mxu0 0.0
        %324 = vmatpush1.msra.mxu0 0.0
        %325 = vmatprep.subr.mxu0 0.0
        %326 = vmatpush1.msra.mxu0 0.0
        %327 = vmatprep.subr.mxu0 0.0
        %328 = vmatpush1.msra.mxu0 0.0
        %329 = vmatprep.subr.mxu0 0.0
        %330 = vmatpush1.msra.mxu0 0.0
        %331 = vmatprep.subr.mxu0 0.0
        %332 = vmatpush1.msra.mxu0 0.0
        %333 = vmatprep.subr.mxu0 0.0
        %334 = vmatpush1.msra.mxu0 0.0
        %335 = vmatprep.mubr.f32.mxu0 0.0
        %336 = vmatmul.mubr.f32.gmra.mrb[0].mxu0 %v269
        %v337 = vpop.f32.mrb[0].mxu0
        %v338 = vadd.f32 0.0, %v337
        %v339 = vpop.f32.mrb[0].mxu0
        %340 = vdwg.mxu0
        %v341 = vld [vmem:[%s230] sm:$0xff]
        %vm342 = vcmask 64512
        %v344 = vsel %vm342, %v341, 0
        %346 = vmatprep.subr.mxu0 0.0
        %347 = vmatpush1.msra.mxu0 %v338
        %348 = vmatprep.subr.mxu0 0.0
        %349 = vmatpush1.msra.mxu0 0.0
        %350 = vmatprep.subr.mxu0 0.0
        %351 = vmatpush1.msra.mxu0 0.0
        %352 = vmatprep.subr.mxu0 0.0
        %353 = vmatpush1.msra.mxu0 0.0
        %354 = vmatprep.subr.mxu0 0.0
        %355 = vmatpush1.msra.mxu0 0.0
        %356 = vmatprep.subr.mxu0 0.0
        %357 = vmatpush1.msra.mxu0 0.0
        %358 = vmatprep.subr.mxu0 0.0
        %359 = vmatpush1.msra.mxu0 0.0
        %360 = vmatprep.subr.mxu0 0.0
        %361 = vmatpush1.msra.mxu0 0.0
        %362 = vmatprep.subr.mxu0 0.0
        %363 = vmatpush1.msra.mxu0 0.0
        %364 = vmatprep.subr.mxu0 0.0
        %365 = vmatpush1.msra.mxu0 0.0
        %366 = vmatprep.subr.mxu0 0.0
        %367 = vmatpush1.msra.mxu0 0.0
        %368 = vmatprep.subr.mxu0 0.0
        %369 = vmatpush1.msra.mxu0 0.0
        %370 = vmatprep.subr.mxu0 0.0
        %371 = vmatpush1.msra.mxu0 0.0
        %372 = vmatprep.subr.mxu0 0.0
        %373 = vmatpush1.msra.mxu0 0.0
        %374 = vmatprep.subr.mxu0 0.0
        %375 = vmatpush1.msra.mxu0 0.0
        %376 = vmatprep.subr.mxu0 0.0
        %377 = vmatpush1.msra.mxu0 0.0
        %378 = vmatprep.subr.mxu0 0.0
        %379 = vmatpush1.msra.mxu0 0.0
        %380 = vmatprep.subr.mxu0 0.0
        %381 = vmatpush1.msra.mxu0 0.0
        %382 = vmatprep.subr.mxu0 0.0
        %383 = vmatpush1.msra.mxu0 0.0
        %384 = vmatprep.subr.mxu0 0.0
        %385 = vmatpush1.msra.mxu0 0.0
        %386 = vmatprep.subr.mxu0 0.0
        %387 = vmatpush1.msra.mxu0 0.0
        %388 = vmatprep.subr.mxu0 0.0
        %389 = vmatpush1.msra.mxu0 0.0
        %390 = vmatprep.subr.mxu0 0.0
        %391 = vmatpush1.msra.mxu0 0.0
        %392 = vmatprep.subr.mxu0 0.0
        %393 = vmatpush1.msra.mxu0 0.0
        %394 = vmatprep.subr.mxu0 0.0
        %395 = vmatpush1.msra.mxu0 0.0
        %396 = vmatprep.subr.mxu0 0.0
        %397 = vmatpush1.msra.mxu0 0.0
        %398 = vmatprep.subr.mxu0 0.0
        %399 = vmatpush1.msra.mxu0 0.0
        %400 = vmatprep.subr.mxu0 0.0
        %401 = vmatpush1.msra.mxu0 0.0
        %402 = vmatprep.subr.mxu0 0.0
        %403 = vmatpush1.msra.mxu0 0.0
        %404 = vmatprep.subr.mxu0 0.0
        %405 = vmatpush1.msra.mxu0 0.0
        %406 = vmatprep.subr.mxu0 0.0
        %407 = vmatpush1.msra.mxu0 0.0
        %408 = vmatprep.subr.mxu0 0.0
        %409 = vmatpush1.msra.mxu0 0.0
        %410 = vmatprep.mubr.f32.mxu0 0.0
        %411 = vmatmul.mubr.f32.gmra.mrb[0].mxu0 %v344
        %v412 = vpop.f32.mrb[0].mxu0
        %v413 = vadd.f32 0.0, %v412
        %v414 = vpop.f32.mrb[0].mxu0
        %415 = vdwg.mxu0
        %v416 = vmax.f32 %v413, 0.0
        %v417 = vld [vmem:[%s3] sm:$0x1]
        %v419 = vlaneseq
        %v420 = vshrl.u32 %v419, 7
        %v421 = vsub.s32 0, %v420
        %v422 = vrot.slane %v417, %v421
        %v424 = vadd.f32 %v416, %v422
        %vm425 = vcmask 261120
        %426 = vst.msk [vmem:[%s263] sm:$0xff] %vm425, %v424
        %s427 = sand.u32 %s126, 1
        %s428 = scalar_lea.sflag [#allocation4], %s427
        %s429 = sand.u32 %s126, 1
        %s430 = smul.addr %s429, 8
        %s431 = scalar_lea.vmem [#allocation8], %s430
        // Predicated region
        $region49: #{tpu_custom_call.1} parent=35 // pred_check
          %p432 = pneg %p136
        $region50: #{tpu_custom_call.1} parent=35 // pred_check_branch
          %434 = sbr.rel (%p432) target = $region52
        $region51: #{tpu_custom_call.1} parent=35 // pred_region
          %s436 = ssub.s32 128, 128
          %437 = vsyncadd %s428, %s436
          %s438 = smul.addr %s24, 128
          %s439 = scalar_lea.hbm %s4, %s438
          %s441 = sshll.u32 %s431, 4
          %s442 = int_to_ptr.vmem [resolvable:$true] %s441
          %444 = dma.vmem_to_hbm [thread:$0]  %s442, 128, %s439, %s428
        $region52: #{tpu_custom_call.1} parent=35 // pred_fallthru
          _
      $region36: #{tpu_custom_call.1} parent=5 // pred_fallthru
        _
      %p445 = scmp.le.s32.totalorder 2, %s19
      // Predicated region
      $region53: #{tpu_custom_call.1} parent=5 // pred_check
        %p446 = pneg %p445
      $region54: #{tpu_custom_call.1} parent=5 // pred_check_branch
        %448 = sbr.rel (%p446) target = $region56
      $region55: #{tpu_custom_call.1} parent=5 // pred_region
        %s449 = ssub.s32 %s19, 2
        // Predicated region
        $region57: #{tpu_custom_call.1} parent=55 // pred_check
          %p450 = pneg %p142
        $region58: #{tpu_custom_call.1} parent=55 // pred_check_branch
          %452 = sbr.rel (%p450) target = $region60
        $region59: #{tpu_custom_call.1} parent=55 // pred_region
          %s453 = sand.u32 %s127, 1
          %s454 = scalar_lea.sflag [#allocation4], %s453
          %s455 = sand.u32 %s127, 1
          %s456 = smul.addr %s455, 8
          %s457 = scalar_lea.vmem [#allocation8], %s456
          %458 = dma.done %s454, 128
        $region60: #{tpu_custom_call.1} parent=55 // pred_fallthru
          _
      $region56: #{tpu_custom_call.1} parent=5 // pred_fallthru
        _
    $region6: #{tpu_custom_call.1} parent=1 // loop_footer
      %s23 = sadd.s32 1, %s19
    $region7: #{tpu_custom_call.1} parent=1 // loop_footer_branch
      %18 = sbr.rel target = $region3
    $region8: #{tpu_custom_call.1} parent=1 // loop_exit
      _
    %459 = vsyncpa [#allocation3], 1
    %s460 = scalar_lea.sflag [#allocation3], 1
    %461 = vsyncpa %s460, 1
    %462 = vsyncpa [#allocation6], 1
    %s463 = scalar_lea.sflag [#allocation6], 1
    %464 = vsyncpa %s463, 1
    %465 = vsyncpa [#allocation4], 1
    %s466 = scalar_lea.sflag [#allocation4], 1
    %467 = vsyncpa %s466, 1

</llo_original>
